<compile_context>
chip_gen: v6e
topology: v6e:2x2x1
jax: 0.10.0
libtpu: 0.0.40
codegen_flags: <defaults>
</compile_context>

<pallas_src>
import functools

import jax
import jax.numpy as jnp
from jax.experimental import pallas as pl
from jax.experimental.pallas import tpu as pltpu


def _round_up(x, m):
    return (x + m - 1) // m * m


# ----------------------------- kernels ---------------------------------------


def _graph_mlp_kernel_fused(x_ref, w1_ref, b1_ref, w2_ref, b2_ref, o_ref):
    # h = relu(x @ W1 + b1)
    h = jnp.dot(x_ref[...], w1_ref[...], preferred_element_type=jnp.float32)
    h = jnp.maximum(h + b1_ref[...], 0.0)
    # TODO(synk): training-mode dropout (p=0.2) omitted; eval-mode dropout is identity.
    # out = h + (h @ W2 + b2)   (bias + residual folded into one expression)
    y = jnp.dot(h.astype(w2_ref.dtype), w2_ref[...], preferred_element_type=jnp.float32)
    o_ref[...] = (h + y + b2_ref[...]).astype(o_ref.dtype)


def _graph_mlp_kernel_tiled(x_ref, w1_ref, b1_ref, w2_ref, b2_ref, o_ref, h_ref):
    j = pl.program_id(1)
    tn = o_ref.shape[-1]

    # h = relu(x @ W1 + b1): computed once per row tile (first output-column step),
    # kept in VMEM scratch and reused for every fc2 column tile + the residual.
    @pl.when(j == 0)
    def _():
        h = jnp.dot(x_ref[...], w1_ref[...], preferred_element_type=jnp.float32)
        h_ref[...] = jnp.maximum(h + b1_ref[...], 0.0)

    # TODO(synk): training-mode dropout (p=0.2) omitted; eval-mode dropout is identity.

    h = h_ref[...]
    col0 = pl.multiple_of(j * tn, 128)
    h_cols = h_ref[:, pl.ds(col0, tn)]  # residual slice of h for this column tile
    # out[:, cols] = h[:, cols] + h @ W2[:, cols] + b2[cols]
    y = jnp.dot(h.astype(w2_ref.dtype), w2_ref[...], preferred_element_type=jnp.float32)
    o_ref[...] = (y + (h_cols + b2_ref[...])).astype(o_ref.dtype)


# ----------------------------- wrapper ----------------------------------------


def _fused_vmem_estimate(bm, k_pad, h_pad, itemsize):
    # double-buffered inputs + output, plus f32 intermediates held in vregs/VMEM.
    in_bytes = (bm * k_pad + k_pad * h_pad + h_pad + h_pad * h_pad + h_pad) * itemsize
    out_bytes = bm * h_pad * itemsize
    return 2 * (in_bytes + out_bytes) + 2 * bm * h_pad * 4


@functools.partial(jax.jit, static_argnames=("block_rows", "block_cols", "fused"))
def graph_mlp(x, w1, b1, w2, b2, *, block_rows=256, block_cols=256, fused=None):
    """x: [..., input_dim] -> [..., hidden_dim]."""
    input_dim = x.shape[-1]
    hidden_dim = w1.shape[1]
    lead_shape = x.shape[:-1]
    x2d = x.reshape(-1, input_dim)
    n = x2d.shape[0]

    # Lane/sublane-friendly padded sizes (pads are zeros; padded rows/cols are
    # sliced away afterwards, and zero padding keeps the valid region exact).
    k_pad = _round_up(input_dim, 128)
    h_pad = _round_up(hidden_dim, 128)
    bm = min(block_rows, _round_up(n, 8))
    n_pad = _round_up(n, bm)

    itemsize = jnp.dtype(x.dtype).itemsize
    if fused is None:
        fused = _fused_vmem_estimate(bm, k_pad, h_pad, itemsize) <= 32 * 1024 * 1024

    x_p = jnp.pad(x2d, ((0, n_pad - n), (0, k_pad - input_dim)))
    w1_p = jnp.pad(w1, ((0, k_pad - input_dim), (0, h_pad - hidden_dim)))
    b1_p = jnp.pad(b1, (0, h_pad - hidden_dim)).reshape(1, h_pad)
    w2_p = jnp.pad(w2, ((0, h_pad - hidden_dim), (0, h_pad - hidden_dim)))
    b2_p = jnp.pad(b2, (0, h_pad - hidden_dim)).reshape(1, h_pad)

    flops = 2 * n_pad * k_pad * h_pad + 2 * n_pad * h_pad * h_pad
    bytes_accessed = (
        x_p.size + w1_p.size + w2_p.size + b1_p.size + b2_p.size + n_pad * h_pad
    ) * itemsize
    cost = pl.CostEstimate(
        flops=flops, transcendentals=0, bytes_accessed=bytes_accessed
    )

    if fused:
        grid = (n_pad // bm,)
        out2d = pl.pallas_call(
            _graph_mlp_kernel_fused,
            out_shape=jax.ShapeDtypeStruct((n_pad, h_pad), x.dtype),
            grid_spec=pltpu.PrefetchScalarGridSpec(
                num_scalar_prefetch=0,
                grid=grid,
                in_specs=[
                    pl.BlockSpec((bm, k_pad), lambda i: (i, 0)),     # x row tile
                    pl.BlockSpec((k_pad, h_pad), lambda i: (0, 0)),  # W1 (resident)
                    pl.BlockSpec((1, h_pad), lambda i: (0, 0)),      # b1 (resident)
                    pl.BlockSpec((h_pad, h_pad), lambda i: (0, 0)),  # W2 (resident)
                    pl.BlockSpec((1, h_pad), lambda i: (0, 0)),      # b2 (resident)
                ],
                out_specs=pl.BlockSpec((bm, h_pad), lambda i: (i, 0)),
            ),
            compiler_params=pltpu.CompilerParams(
                dimension_semantics=("parallel",),
                vmem_limit_bytes=48 * 1024 * 1024,
            ),
            cost_estimate=cost,
        )(x_p, w1_p, b1_p, w2_p, b2_p)
    else:
        tn = block_cols if (h_pad % block_cols == 0) else 128
        tn = min(tn, h_pad)
        grid = (n_pad // bm, h_pad // tn)
        out2d = pl.pallas_call(
            _graph_mlp_kernel_tiled,
            out_shape=jax.ShapeDtypeStruct((n_pad, h_pad), x.dtype),
            grid_spec=pltpu.PrefetchScalarGridSpec(
                num_scalar_prefetch=0,
                grid=grid,
                in_specs=[
                    pl.BlockSpec((bm, k_pad), lambda i, j: (i, 0)),     # x row tile
                    pl.BlockSpec((k_pad, h_pad), lambda i, j: (0, 0)),  # W1 (full)
                    pl.BlockSpec((1, h_pad), lambda i, j: (0, 0)),      # b1 (full)
                    pl.BlockSpec((h_pad, tn), lambda i, j: (0, j)),     # W2 column tile
                    pl.BlockSpec((1, tn), lambda i, j: (0, j)),         # b2 column tile
                ],
                out_specs=pl.BlockSpec((bm, tn), lambda i, j: (i, j)),
                scratch_shapes=[pltpu.VMEM((bm, h_pad), jnp.float32)],  # h = relu(fc1(x))
            ),
            compiler_params=pltpu.CompilerParams(
                dimension_semantics=("parallel", "arbitrary"),
                vmem_limit_bytes=48 * 1024 * 1024,
            ),
            cost_estimate=cost,
        )(x_p, w1_p, b1_p, w2_p, b2_p)

    out2d = out2d[:n, :hidden_dim]
    return out2d.reshape(*lead_shape, hidden_dim)


def init_params(key, input_dim, hidden_dim, dtype=jnp.float32):
    """Deterministic init mimicking nn.Linear's uniform(-1/sqrt(fan_in), 1/sqrt(fan_in))."""
    k1, k2, k3, k4 = jax.random.split(key, 4)
    lim1 = 1.0 / (input_dim ** 0.5)
    lim2 = 1.0 / (hidden_dim ** 0.5)
    w1 = jax.random.uniform(k1, (input_dim, hidden_dim), dtype, -lim1, lim1)
    b1 = jax.random.uniform(k2, (hidden_dim,), dtype, -lim1, lim1)
    w2 = jax.random.uniform(k3, (hidden_dim, hidden_dim), dtype, -lim2, lim2)
    b2 = jax.random.uniform(k4, (hidden_dim,), dtype, -lim2, lim2)
    return w1, b1, w2, b2


if __name__ == "__main__":
    key = jax.random.PRNGKey(0)
    kx, kp = jax.random.split(key)

    batch, seq, input_dim, hidden_dim = 2, 8, 16, 32
    x = jax.random.normal(kx, (batch, seq, input_dim), jnp.float32)
    w1, b1, w2, b2 = init_params(kp, input_dim, hidden_dim)

    # reference (pure JAX) forward semantics
    h_ref = jax.nn.relu(x @ w1 + b1)
    ref = h_ref + (h_ref @ w2 + b2)

    # fused path (default for these shapes)
    out = jax.block_until_ready(graph_mlp(x, w1, b1, w2, b2))
    assert out.shape == (batch, seq, hidden_dim)
    assert jnp.allclose(out, ref, atol=1e-5, rtol=1e-5)

    # tiled path (forced) to exercise the large-hidden code path too
    out_t = jax.block_until_ready(graph_mlp(x, w1, b1, w2, b2, fused=False))
    assert jnp.allclose(out_t, ref, atol=1e-5, rtol=1e-5)

    print("KERNEL_OK")
</pallas_src>

<mosaic_0001>
module attributes {stable_mosaic.version = 11 : i64} {
  func.func @_graph_mlp_kernel_fused(%arg0: i32, %arg1: memref<16x128xf32, #tpu.memory_space<vmem>>, %arg2: memref<128x128xf32, #tpu.memory_space<vmem>>, %arg3: memref<1x128xf32, #tpu.memory_space<vmem>>, %arg4: memref<128x128xf32, #tpu.memory_space<vmem>>, %arg5: memref<1x128xf32, #tpu.memory_space<vmem>>, %arg6: memref<16x128xf32, #tpu.memory_space<vmem>>) attributes {dimension_semantics = [#tpu.dimension_semantics<parallel>], iteration_bounds = array<i64: 1>, scalar_prefetch = 0 : i64, scratch_operands = 0 : i64, tpu.core_type = #tpu.core_type<tc>, window_params = [{transform_indices = @transform_0, window_bounds = array<i64: 16, 128>}, {pipeline_mode = #tpu.pipeline_mode<synchronous>, transform_indices = @transform_1, window_bounds = array<i64: 128, 128>}, {pipeline_mode = #tpu.pipeline_mode<synchronous>, transform_indices = @transform_2, window_bounds = array<i64: 1, 128>}, {pipeline_mode = #tpu.pipeline_mode<synchronous>, transform_indices = @transform_3, window_bounds = array<i64: 128, 128>}, {pipeline_mode = #tpu.pipeline_mode<synchronous>, transform_indices = @transform_4, window_bounds = array<i64: 1, 128>}, {transform_indices = @transform_5, window_bounds = array<i64: 16, 128>}]} {
    %c0 = arith.constant 0 : index
    %c0_0 = arith.constant 0 : index
    %0 = vector.load %arg1[%c0, %c0_0] : memref<16x128xf32, #tpu.memory_space<vmem>>, vector<16x128xf32>
    %c0_1 = arith.constant 0 : index
    %c0_2 = arith.constant 0 : index
    %1 = vector.load %arg2[%c0_1, %c0_2] : memref<128x128xf32, #tpu.memory_space<vmem>>, vector<128x128xf32>
    %cst = arith.constant dense<0.000000e+00> : vector<16x128xf32>
    %2 = tpu.matmul %0, %1, %cst {dimension_numbers = #tpu.dot_dimension_numbers<[1], [0], [0], [1], [0, 0, 1, 1], [], []>} : vector<16x128xf32>, vector<128x128xf32>, vector<16x128xf32> -> vector<16x128xf32>
    %c0_3 = arith.constant 0 : index
    %c0_4 = arith.constant 0 : index
    %3 = vector.load %arg3[%c0_3, %c0_4] : memref<1x128xf32, #tpu.memory_space<vmem>>, vector<1x128xf32>
    %4 = vector.broadcast %3 : vector<1x128xf32> to vector<16x128xf32>
    %5 = arith.addf %2, %4 : vector<16x128xf32>
    %cst_5 = arith.constant 0.000000e+00 : f32
    %6 = vector.broadcast %cst_5 : f32 to vector<16x128xf32>
    %7 = arith.maximumf %5, %6 : vector<16x128xf32>
    %c0_6 = arith.constant 0 : index
    %c0_7 = arith.constant 0 : index
    %8 = vector.load %arg4[%c0_6, %c0_7] : memref<128x128xf32, #tpu.memory_space<vmem>>, vector<128x128xf32>
    %cst_8 = arith.constant dense<0.000000e+00> : vector<16x128xf32>
    %9 = tpu.matmul %7, %8, %cst_8 {dimension_numbers = #tpu.dot_dimension_numbers<[1], [0], [0], [1], [0, 0, 1, 1], [], []>} : vector<16x128xf32>, vector<128x128xf32>, vector<16x128xf32> -> vector<16x128xf32>
    %10 = arith.addf %7, %9 : vector<16x128xf32>
    %c0_9 = arith.constant 0 : index
    %c0_10 = arith.constant 0 : index
    %11 = vector.load %arg5[%c0_9, %c0_10] : memref<1x128xf32, #tpu.memory_space<vmem>>, vector<1x128xf32>
    %12 = vector.broadcast %11 : vector<1x128xf32> to vector<16x128xf32>
    %13 = arith.addf %10, %12 : vector<16x128xf32>
    %c0_11 = arith.constant 0 : index
    %c0_12 = arith.constant 0 : index
    %14 = vector.load %arg6[%c0_11, %c0_12] : memref<16x128xf32, #tpu.memory_space<vmem>>, vector<16x128xf32>
    tpu.vector_store %arg6[%c0_11, %c0_12], %13 {strides = array<i32>} : memref<16x128xf32, #tpu.memory_space<vmem>>, vector<16x128xf32>,
    return
  }
  func.func @transform_0(%arg0: i32) -> (i32, i32) {
    %c0_i32 = arith.constant 0 : i32
    %c0_i32_0 = arith.constant 0 : i32
    return %arg0, %c0_i32 : i32, i32
  }
  func.func @transform_1(%arg0: i32) -> (i32, i32) {
    %c0_i32 = arith.constant 0 : i32
    %c0_i32_0 = arith.constant 0 : i32
    %c0_i32_1 = arith.constant 0 : i32
    return %c0_i32, %c0_i32_0 : i32, i32
  }
  func.func @transform_2(%arg0: i32) -> (i32, i32) {
    %c0_i32 = arith.constant 0 : i32
    %c0_i32_0 = arith.constant 0 : i32
    %c0_i32_1 = arith.constant 0 : i32
    return %c0_i32, %c0_i32_0 : i32, i32
  }
  func.func @transform_3(%arg0: i32) -> (i32, i32) {
    %c0_i32 = arith.constant 0 : i32
    %c0_i32_0 = arith.constant 0 : i32
    %c0_i32_1 = arith.constant 0 : i32
    return %c0_i32, %c0_i32_0 : i32, i32
  }
  func.func @transform_4(%arg0: i32) -> (i32, i32) {
    %c0_i32 = arith.constant 0 : i32
    %c0_i32_0 = arith.constant 0 : i32
    %c0_i32_1 = arith.constant 0 : i32
    return %c0_i32, %c0_i32_0 : i32, i32
  }
  func.func @transform_5(%arg0: i32) -> (i32, i32) {
    %c0_i32 = arith.constant 0 : i32
    %c0_i32_0 = arith.constant 0 : i32
    return %arg0, %c0_i32 : i32, i32
  }
}

</mosaic_0001>

<llo_original>
// kernel: graph_mlp.1
$region0: #{graph_mlp.1}
  #allocation0 [shape = 'u32[]', space=smem, size = 0x4, offset = 0x4, fixed_abs, tag = 'smem constant byte address 0x4 - core index']
  #allocation1 [shape = 'u32[144,128]{1,0:T(1,128)}', space=vmem, size = 0x12000, scoped, tag = 'internal scratch']
  %s0 = inlined_call_operand.vmem [shape: f32[16,128], index: 0, kind: input, shape index: {}]
  %s1 = inlined_call_operand.vmem [shape: f32[128,128], index: 1, kind: input, shape index: {}]
  %s2 = inlined_call_operand.vmem [shape: f32[1,128], index: 2, kind: input, shape index: {}]
  %s3 = inlined_call_operand.vmem [shape: f32[128,128], index: 3, kind: input, shape index: {}]
  %s4 = inlined_call_operand.vmem [shape: f32[1,128], index: 4, kind: input, shape index: {}]
  %s5 = inlined_call_operand.vmem [shape: f32[16,128], index: 5, kind: output, shape index: {}]
  %s6 = sld [smem:[#allocation0]]
  $region30: #{graph_mlp.1} parent=0
    _
  %s8 = ssub.s32 1, %s6
  %s9 = scalar_select 0, %s8, %s6
  // Predicated region
  $region2: #{graph_mlp.1} parent=0 // pred_check
    _
  $region3: #{graph_mlp.1} parent=0 // pred_check_branch
    %11 = sbr.rel (0) target = $region5
  $region4: #{graph_mlp.1} parent=0 // pred_region
    _
  $region5: #{graph_mlp.1} parent=0 // pred_fallthru
    _
  // Predicated region
  $region6: #{graph_mlp.1} parent=0 // pred_check
    _
  $region7: #{graph_mlp.1} parent=0 // pred_check_branch
    %13 = sbr.rel (0) target = $region9
  $region8: #{graph_mlp.1} parent=0 // pred_region
    _
  $region9: #{graph_mlp.1} parent=0 // pred_fallthru
    _
  // Predicated region
  $region10: #{graph_mlp.1} parent=0 // pred_check
    _
  $region11: #{graph_mlp.1} parent=0 // pred_check_branch
    %15 = sbr.rel (0) target = $region13
  $region12: #{graph_mlp.1} parent=0 // pred_region
    _
  $region13: #{graph_mlp.1} parent=0 // pred_fallthru
    _
  // Predicated region
  $region14: #{graph_mlp.1} parent=0 // pred_check
    _
  $region15: #{graph_mlp.1} parent=0 // pred_check_branch
    %17 = sbr.rel (0) target = $region17
  $region16: #{graph_mlp.1} parent=0 // pred_region
    _
  $region17: #{graph_mlp.1} parent=0 // pred_fallthru
    _
  // Predicated region
  $region18: #{graph_mlp.1} parent=0 // pred_check
    _
  $region19: #{graph_mlp.1} parent=0 // pred_check_branch
    %19 = sbr.rel (0) target = $region21
  $region20: #{graph_mlp.1} parent=0 // pred_region
    _
  $region21: #{graph_mlp.1} parent=0 // pred_fallthru
    _
  %v20 = vld [vmem:[%s0] sm:$0xff]
  %v21 = vld [vmem:[%s0 + $0x8] sm:$0xff]
  %v22 = vld [vmem:[%s1] sm:$0xff]
  %v23 = vld [vmem:[%s1 + $0x8] sm:$0xff]
  %v24 = vld [vmem:[%s1 + $0x10] sm:$0xff]
  %v25 = vld [vmem:[%s1 + $0x18] sm:$0xff]
  %v26 = vld [vmem:[%s1 + $0x20] sm:$0xff]
  %v27 = vld [vmem:[%s1 + $0x28] sm:$0xff]
  %v28 = vld [vmem:[%s1 + $0x30] sm:$0xff]
  %v29 = vld [vmem:[%s1 + $0x38] sm:$0xff]
  %v30 = vld [vmem:[%s1 + $0x40] sm:$0xff]
  %v31 = vld [vmem:[%s1 + $0x48] sm:$0xff]
  %v32 = vld [vmem:[%s1 + $0x50] sm:$0xff]
  %v33 = vld [vmem:[%s1 + $0x58] sm:$0xff]
  %v34 = vld [vmem:[%s1 + $0x60] sm:$0xff]
  %v35 = vld [vmem:[%s1 + $0x68] sm:$0xff]
  %v36 = vld [vmem:[%s1 + $0x70] sm:$0xff]
  %v37 = vld [vmem:[%s1 + $0x78] sm:$0xff]
  %v38 = vld [vmem:[%s2] sm:$0x1]
  %v40 = vlaneseq
  %v41 = vshrl.u32 %v40, 7
  %v42 = vsub.s32 0, %v41
  %v43 = vrot.slane %v38, %v42
  %45 = vmatprep.subr.mxu0 0.0
  %46 = vmatpush1.msra.mxu0 %v37
  %47 = vmatprep.subr.mxu0 0.0
  %48 = vmatpush1.msra.mxu0 %v36
  %49 = vmatprep.subr.mxu0 0.0
  %50 = vmatpush1.msra.mxu0 %v35
  %51 = vmatprep.subr.mxu0 0.0
  %52 = vmatpush1.msra.mxu0 %v34
  %53 = vmatprep.subr.mxu0 0.0
  %54 = vmatpush1.msra.mxu0 %v33
  %55 = vmatprep.subr.mxu0 0.0
  %56 = vmatpush1.msra.mxu0 %v32
  %57 = vmatprep.subr.mxu0 0.0
  %58 = vmatpush1.msra.mxu0 %v31
  %59 = vmatprep.subr.mxu0 0.0
  %60 = vmatpush1.msra.mxu0 %v30
  %61 = vmatprep.subr.mxu0 0.0
  %62 = vmatpush1.msra.mxu0 %v29
  %63 = vmatprep.subr.mxu0 0.0
  %64 = vmatpush1.msra.mxu0 %v28
  %65 = vmatprep.subr.mxu0 0.0
  %66 = vmatpush1.msra.mxu0 %v27
  %67 = vmatprep.subr.mxu0 0.0
  %68 = vmatpush1.msra.mxu0 %v26
  %69 = vmatprep.subr.mxu0 0.0
  %70 = vmatpush1.msra.mxu0 %v25
  %71 = vmatprep.subr.mxu0 0.0
  %72 = vmatpush1.msra.mxu0 %v24
  %73 = vmatprep.subr.mxu0 0.0
  %74 = vmatpush1.msra.mxu0 %v23
  %75 = vmatprep.subr.mxu0 0.0
  %76 = vmatpush1.msra.mxu0 %v22
  %77 = vmatprep.subr.mxu0 0.0
  %78 = vmatpush2.msra.mxu0 0.0
  %79 = vmatprep.subr.mxu0 0.0
  %80 = vmatpush2.msra.mxu0 0.0
  %81 = vmatprep.subr.mxu0 0.0
  %82 = vmatpush2.msra.mxu0 0.0
  %83 = vmatprep.subr.mxu0 0.0
  %84 = vmatpush2.msra.mxu0 0.0
  %85 = vmatprep.subr.mxu0 0.0
  %86 = vmatpush2.msra.mxu0 0.0
  %87 = vmatprep.subr.mxu0 0.0
  %88 = vmatpush2.msra.mxu0 0.0
  %89 = vmatprep.subr.mxu0 0.0
  %90 = vmatpush2.msra.mxu0 0.0
  %91 = vmatprep.subr.mxu0 0.0
  %92 = vmatpush2.msra.mxu0 0.0
  %93 = vmatprep.subr.mxu0 0.0
  %94 = vmatpush2.msra.mxu0 0.0
  %95 = vmatprep.subr.mxu0 0.0
  %96 = vmatpush2.msra.mxu0 0.0
  %97 = vmatprep.subr.mxu0 0.0
  %98 = vmatpush2.msra.mxu0 0.0
  %99 = vmatprep.subr.mxu0 0.0
  %100 = vmatpush2.msra.mxu0 0.0
  %101 = vmatprep.subr.mxu0 0.0
  %102 = vmatpush2.msra.mxu0 0.0
  %103 = vmatprep.subr.mxu0 0.0
  %104 = vmatpush2.msra.mxu0 0.0
  %105 = vmatprep.subr.mxu0 0.0
  %106 = vmatpush2.msra.mxu0 0.0
  %107 = vmatprep.subr.mxu0 0.0
  %108 = vmatpush2.msra.mxu0 0.0
  %109 = vmatprep.mubr.f32.mxu0 0.0
  %110 = vmatmul.mubr.f32.gmra.mxu0 %v20
  %v111 = vpop.f32.mrf.mxu0
  %v112 = vadd.f32 %v43, %v111
  %v113 = vpop.f32.mrf.mxu0
  %114 = vmatprep.mubr.f32.mxu0 0.0
  %115 = vmatmul.mubr.f32.gmra.mxu0 %v21
  %v116 = vpop.f32.mrf.mxu0
  %v117 = vadd.f32 %v43, %v116
  %v118 = vpop.f32.mrf.mxu0
  %119 = vdwg.mxu0
  %v120 = vmax.f32 %v112, 0.0
  %v121 = vmax.f32 %v117, 0.0
  %v122 = vld [vmem:[%s3] sm:$0xff]
  %v123 = vld [vmem:[%s3 + $0x8] sm:$0xff]
  %v124 = vld [vmem:[%s3 + $0x10] sm:$0xff]
  %v125 = vld [vmem:[%s3 + $0x18] sm:$0xff]
  %v126 = vld [vmem:[%s3 + $0x20] sm:$0xff]
  %v127 = vld [vmem:[%s3 + $0x28] sm:$0xff]
  %v128 = vld [vmem:[%s3 + $0x30] sm:$0xff]
  %v129 = vld [vmem:[%s3 + $0x38] sm:$0xff]
  %v130 = vld [vmem:[%s3 + $0x40] sm:$0xff]
  %v131 = vld [vmem:[%s3 + $0x48] sm:$0xff]
  %v132 = vld [vmem:[%s3 + $0x50] sm:$0xff]
  %v133 = vld [vmem:[%s3 + $0x58] sm:$0xff]
  %v134 = vld [vmem:[%s3 + $0x60] sm:$0xff]
  %v135 = vld [vmem:[%s3 + $0x68] sm:$0xff]
  %v136 = vld [vmem:[%s3 + $0x70] sm:$0xff]
  %v137 = vld [vmem:[%s3 + $0x78] sm:$0xff]
  %138 = vmatprep.subr.mxu0 0.0
  %139 = vmatpush1.msra.mxu0 %v137
  %140 = vmatprep.subr.mxu0 0.0
  %141 = vmatpush1.msra.mxu0 %v136
  %142 = vmatprep.subr.mxu0 0.0
  %143 = vmatpush1.msra.mxu0 %v135
  %144 = vmatprep.subr.mxu0 0.0
  %145 = vmatpush1.msra.mxu0 %v134
  %146 = vmatprep.subr.mxu0 0.0
  %147 = vmatpush1.msra.mxu0 %v133
  %148 = vmatprep.subr.mxu0 0.0
  %149 = vmatpush1.msra.mxu0 %v132
  %150 = vmatprep.subr.mxu0 0.0
  %151 = vmatpush1.msra.mxu0 %v131
  %152 = vmatprep.subr.mxu0 0.0
  %153 = vmatpush1.msra.mxu0 %v130
  %154 = vmatprep.subr.mxu0 0.0
  %155 = vmatpush1.msra.mxu0 %v129
  %156 = vmatprep.subr.mxu0 0.0
  %157 = vmatpush1.msra.mxu0 %v128
  %158 = vmatprep.subr.mxu0 0.0
  %159 = vmatpush1.msra.mxu0 %v127
  %160 = vmatprep.subr.mxu0 0.0
  %161 = vmatpush1.msra.mxu0 %v126
  %162 = vmatprep.subr.mxu0 0.0
  %163 = vmatpush1.msra.mxu0 %v125
  %164 = vmatprep.subr.mxu0 0.0
  %165 = vmatpush1.msra.mxu0 %v124
  %166 = vmatprep.subr.mxu0 0.0
  %167 = vmatpush1.msra.mxu0 %v123
  %168 = vmatprep.subr.mxu0 0.0
  %169 = vmatpush1.msra.mxu0 %v122
  %170 = vmatprep.subr.mxu0 0.0
  %171 = vmatpush2.msra.mxu0 0.0
  %172 = vmatprep.subr.mxu0 0.0
  %173 = vmatpush2.msra.mxu0 0.0
  %174 = vmatprep.subr.mxu0 0.0
  %175 = vmatpush2.msra.mxu0 0.0
  %176 = vmatprep.subr.mxu0 0.0
  %177 = vmatpush2.msra.mxu0 0.0
  %178 = vmatprep.subr.mxu0 0.0
  %179 = vmatpush2.msra.mxu0 0.0
  %180 = vmatprep.subr.mxu0 0.0
  %181 = vmatpush2.msra.mxu0 0.0
  %182 = vmatprep.subr.mxu0 0.0
  %183 = vmatpush2.msra.mxu0 0.0
  %184 = vmatprep.subr.mxu0 0.0
  %185 = vmatpush2.msra.mxu0 0.0
  %186 = vmatprep.subr.mxu0 0.0
  %187 = vmatpush2.msra.mxu0 0.0
  %188 = vmatprep.subr.mxu0 0.0
  %189 = vmatpush2.msra.mxu0 0.0
  %190 = vmatprep.subr.mxu0 0.0
  %191 = vmatpush2.msra.mxu0 0.0
  %192 = vmatprep.subr.mxu0 0.0
  %193 = vmatpush2.msra.mxu0 0.0
  %194 = vmatprep.subr.mxu0 0.0
  %195 = vmatpush2.msra.mxu0 0.0
  %196 = vmatprep.subr.mxu0 0.0
  %197 = vmatpush2.msra.mxu0 0.0
  %198 = vmatprep.subr.mxu0 0.0
  %199 = vmatpush2.msra.mxu0 0.0
  %200 = vmatprep.subr.mxu0 0.0
  %201 = vmatpush2.msra.mxu0 0.0
  %202 = vmatprep.mubr.f32.mxu0 0.0
  %203 = vmatmul.mubr.f32.gmra.mxu0 %v120
  %v204 = vpop.f32.mrf.mxu0
  %v205 = vadd.f32 0.0, %v204
  %v206 = vpop.f32.mrf.mxu0
  %207 = vmatprep.mubr.f32.mxu0 0.0
  %208 = vmatmul.mubr.f32.gmra.mxu0 %v121
  %v209 = vpop.f32.mrf.mxu0
  %v210 = vadd.f32 0.0, %v209
  %v211 = vpop.f32.mrf.mxu0
  %212 = vdwg.mxu0
  %v213 = vadd.f32 %v120, %v205
  %v214 = vadd.f32 %v121, %v210
  %v215 = vld [vmem:[%s4] sm:$0x1]
  %v217 = vlaneseq
  %v218 = vshrl.u32 %v217, 7
  %v219 = vsub.s32 0, %v218
  %v220 = vrot.slane %v215, %v219
  %v222 = vadd.f32 %v213, %v220
  %v223 = vadd.f32 %v214, %v220
  %224 = vst [vmem:[%s5] sm:$0xff] %v222
  %225 = vst [vmem:[%s5 + $0x8] sm:$0xff] %v223
  // Predicated region
  $region22: #{graph_mlp.1} parent=0 // pred_check
    _
  $region23: #{graph_mlp.1} parent=0 // pred_check_branch
    %227 = sbr.rel (0) target = $region25
  $region24: #{graph_mlp.1} parent=0 // pred_region
    _
  $region25: #{graph_mlp.1} parent=0 // pred_fallthru
    _
  // Predicated region
  $region26: #{graph_mlp.1} parent=0 // pred_check
    _
  $region27: #{graph_mlp.1} parent=0 // pred_check_branch
    %229 = sbr.rel (0) target = $region29
  $region28: #{graph_mlp.1} parent=0 // pred_region
    _
  $region29: #{graph_mlp.1} parent=0 // pred_fallthru
    _

</llo_original>
